<compile_context>
chip_gen: v5e
topology: v5e:2x2
jax: 0.10.0
libtpu: 0.0.40
codegen_flags: <defaults>
</compile_context>

<pallas_src>
import jax
import jax.numpy as jnp
from jax.experimental import pallas as pl
from jax.experimental.pallas import tpu as pltpu

LANE = 128


# ---------------------------------------------------------------------------
# Kernel
# ---------------------------------------------------------------------------
def _mlp_kernel(*refs):
    """refs = (x_ref, w_0_ref, ..., w_{L-1}_ref, o_ref).

    Whole fused MLP for one batch tile: chained MXU matmuls with f32
    accumulation, ReLU applied on the f32 accumulator between layers.
    """
    x_ref = refs[0]
    w_refs = refs[1:-1]
    o_ref = refs[-1]

    h = x_ref[...]
    n = len(w_refs)
    for i, w_ref in enumerate(w_refs):
        acc = jnp.dot(h, w_ref[...], preferred_element_type=jnp.float32)
        if i < n - 1:
            # ReLU on the f32 accumulator, downcast only as input of next matmul.
            acc = jnp.maximum(acc, 0.0)
            h = acc.astype(w_refs[i + 1].dtype)
        else:
            h = acc
    o_ref[...] = h.astype(o_ref.dtype)


# ---------------------------------------------------------------------------
# Wrapper
# ---------------------------------------------------------------------------
def _round_up(n, m):
    return (n + m - 1) // m * m


def one_class_forward(x, weights, *, block_b=None,
                      compute_dtype=jnp.bfloat16,
                      single_buffer_weights=True):
    """Pallas forward pass of OneClassLayer's feedforward model.

    x:       [B, input_dim] float32
    weights: list of [in_features, out_features] float32 arrays
             (transpose of PyTorch nn.Linear's [out, in])
    returns: [B, rep_dim] float32
    """
    B, in_dim = x.shape
    rep_dim = weights[-1].shape[1]
    rep_pad = _round_up(rep_dim, LANE)  # lane-dense OUTPUT store only

    itm = jnp.dtype(compute_dtype).itemsize
    sub = 16 if itm < 4 else 8  # bf16 packs 16 sublanes per vreg

    # Cast weights once; only the final layer's output dim gets zero-padded.
    w_padded = []
    for li, w in enumerate(weights):
        if li == len(weights) - 1 and rep_pad != rep_dim:
            w = jnp.pad(w, ((0, 0), (0, rep_pad - rep_dim)))
        w_padded.append(w.astype(compute_dtype))

    # ---- batch tiling ------------------------------------------------------
    # Mem-bound regime: big tiles (cap 1024) amortize the ~0.35 us step
    # overhead; for large B keep >= 2 grid steps so v7x's two TensorCores both
    # get "parallel" work (no cost on single-TC v5e/v6e).
    if block_b is None:
        cap = 1024
        if B < 256:
            block_b = min(_round_up(B, sub), cap)
        else:
            block_b = min(_round_up(pl.cdiv(B, 2), sub), cap)
    block_b = _round_up(block_b, sub)
    B_pad = _round_up(B, block_b)

    x_p = x
    if B_pad != B:
        x_p = jnp.pad(x_p, ((0, B_pad - B), (0, 0)))  # zero rows (sliced off later)
    x_p = x_p.astype(compute_dtype)

    grid = (B_pad // block_b,)

    # VMEM budget: double-buffered x/out tiles + resident weights (+50% slack),
    # clamped to [32 MiB, 64 MiB] so it is valid on v7x (64 MiB physical).
    w_bytes = sum(int(w.size) * itm for w in w_padded)
    est = (2 * block_b * in_dim * itm                        # x tile (x2 buffers)
           + 2 * block_b * rep_pad * 4                       # f32 out tile (x2)
           + (1 if single_buffer_weights else 2) * w_bytes   # resident weights
           + block_b * max(w.shape[1] for w in w_padded) * 4)  # live f32 act
    vmem_limit = min(64 * 1024 * 1024, max(32 * 1024 * 1024, int(1.5 * est)))

    def build(single_buf):
        in_specs = [pl.BlockSpec((block_b, in_dim), lambda i: (i, 0))]
        for w in w_padded:
            if single_buf:
                # Constant index_map => never re-DMA'd; Buffered(1) drops the
                # pointless second buffer (matters on v7x once H scales up).
                in_specs.append(pl.BlockSpec(w.shape, lambda i: (0, 0),
                                             pipeline_mode=pl.Buffered(1)))
            else:
                in_specs.append(pl.BlockSpec(w.shape, lambda i: (0, 0)))
        out_spec = pl.BlockSpec((block_b, rep_pad), lambda i: (i, 0))
        return pl.pallas_call(
            _mlp_kernel,
            out_shape=jax.ShapeDtypeStruct((B_pad, rep_pad), jnp.float32),
            grid_spec=pltpu.PrefetchScalarGridSpec(
                num_scalar_prefetch=0,
                grid=grid,
                in_specs=in_specs,
                out_specs=out_spec,
            ),
            compiler_params=pltpu.CompilerParams(
                dimension_semantics=("parallel",),
                vmem_limit_bytes=vmem_limit,
            ),
        )

    if single_buffer_weights:
        try:
            out_padded = build(True)(x_p, *w_padded)
        except Exception:
            # Fallback for JAX builds where Buffered(1) is not supported by the
            # top-level pipeline: identical semantics, default double buffering.
            out_padded = build(False)(x_p, *w_padded)
    else:
        out_padded = build(False)(x_p, *w_padded)

    # TODO(synk): for production batch sizes, let the consumer accept the
    # (B_pad, 128) slab (or fuse this slice into the next op) to avoid an extra
    # HBM pass over the output.
    return out_padded[:B, :rep_dim]


# ---------------------------------------------------------------------------
# Params + reference
# ---------------------------------------------------------------------------
def init_one_class_params(key, input_dim, rep_dim, num_hidden, num_layers):
    """Deterministic init mirroring nn.Linear's default U(-1/sqrt(fan_in), +)."""
    dims = [input_dim] + [num_hidden] * num_layers + [rep_dim]
    weights = []
    for fan_in, fan_out in zip(dims[:-1], dims[1:]):
        key, sub = jax.random.split(key)
        bound = 1.0 / jnp.sqrt(jnp.float32(fan_in))
        # stored as [in, out] (transpose of PyTorch's [out, in])
        w = jax.random.uniform(
            sub, (fan_in, fan_out), dtype=jnp.float32, minval=-bound, maxval=bound
        )
        weights.append(w)
    return weights


def _reference_forward(x, weights):
    h = x
    for i, w in enumerate(weights):
        h = h @ w
        if i < len(weights) - 1:
            h = jnp.maximum(h, 0.0)
    return h


if __name__ == "__main__":
    # Module hyper-params (defaults of OneClassLayer): num_layers=4, num_hidden=32.
    input_dim = 16
    rep_dim = 8
    num_hidden = 32
    num_layers = 4
    batch = 16

    key = jax.random.PRNGKey(0)
    kx, kw = jax.random.split(key)

    x = jax.random.normal(kx, (batch, input_dim), dtype=jnp.float32)
    weights = init_one_class_params(kw, input_dim, rep_dim, num_hidden, num_layers)

    ref = _reference_forward(x, weights)

    # f32 path: exact check vs reference (single grid step for the tiny batch).
    out_f32 = jax.block_until_ready(
        one_class_forward(x, weights, compute_dtype=jnp.float32)
    )
    assert out_f32.shape == (batch, rep_dim)
    assert jnp.allclose(out_f32, ref, atol=1e-5, rtol=1e-5), "f32 mismatch vs reference"

    # Default path: bf16 operands, f32 MXU accumulation + f32 ReLU.
    out_bf16 = jax.block_until_ready(one_class_forward(x, weights))
    assert out_bf16.shape == (batch, rep_dim)
    assert jnp.allclose(out_bf16, ref, atol=5e-2, rtol=5e-2), "bf16 mismatch vs reference"

    # TODO(synk): fit()/SoftBoundaryLoss are training-time only and not part of
    # forward(); not implemented as a kernel.
    print("KERNEL_OK")
</pallas_src>

<mosaic_0001>
module attributes {stable_mosaic.version = 11 : i64} {
  func.func @_mlp_kernel(%arg0: i32, %arg1: memref<16x16xf32, #tpu.memory_space<vmem>>, %arg2: memref<16x32xf32, #tpu.memory_space<vmem>>, %arg3: memref<32x32xf32, #tpu.memory_space<vmem>>, %arg4: memref<32x32xf32, #tpu.memory_space<vmem>>, %arg5: memref<32x32xf32, #tpu.memory_space<vmem>>, %arg6: memref<32x128xf32, #tpu.memory_space<vmem>>, %arg7: memref<16x128xf32, #tpu.memory_space<vmem>>) attributes {dimension_semantics = [#tpu.dimension_semantics<parallel>], iteration_bounds = array<i64: 1>, scalar_prefetch = 0 : i64, scratch_operands = 0 : i64, tpu.core_type = #tpu.core_type<tc>, window_params = [{transform_indices = @transform_0, window_bounds = array<i64: 16, 16>}, {pipeline_mode = #tpu.pipeline_mode<synchronous>, transform_indices = @transform_1, window_bounds = array<i64: 16, 32>}, {pipeline_mode = #tpu.pipeline_mode<synchronous>, transform_indices = @transform_2, window_bounds = array<i64: 32, 32>}, {pipeline_mode = #tpu.pipeline_mode<synchronous>, transform_indices = @transform_3, window_bounds = array<i64: 32, 32>}, {pipeline_mode = #tpu.pipeline_mode<synchronous>, transform_indices = @transform_4, window_bounds = array<i64: 32, 32>}, {pipeline_mode = #tpu.pipeline_mode<synchronous>, transform_indices = @transform_5, window_bounds = array<i64: 32, 128>}, {transform_indices = @transform_6, window_bounds = array<i64: 16, 128>}]} {
    %c0 = arith.constant 0 : index
    %c0_0 = arith.constant 0 : index
    %0 = vector.load %arg1[%c0, %c0_0] : memref<16x16xf32, #tpu.memory_space<vmem>>, vector<16x16xf32>
    %c0_1 = arith.constant 0 : index
    %c0_2 = arith.constant 0 : index
    %1 = vector.load %arg2[%c0_1, %c0_2] : memref<16x32xf32, #tpu.memory_space<vmem>>, vector<16x32xf32>
    %cst = arith.constant dense<0.000000e+00> : vector<16x32xf32>
    %2 = tpu.matmul %0, %1, %cst {dimension_numbers = #tpu.dot_dimension_numbers<[1], [0], [0], [1], [0, 0, 1, 1], [], []>} : vector<16x16xf32>, vector<16x32xf32>, vector<16x32xf32> -> vector<16x32xf32>
    %cst_3 = arith.constant 0.000000e+00 : f32
    %3 = vector.broadcast %cst_3 : f32 to vector<16x32xf32>
    %4 = arith.maximumf %2, %3 : vector<16x32xf32>
    %c0_4 = arith.constant 0 : index
    %c0_5 = arith.constant 0 : index
    %5 = vector.load %arg3[%c0_4, %c0_5] : memref<32x32xf32, #tpu.memory_space<vmem>>, vector<32x32xf32>
    %cst_6 = arith.constant dense<0.000000e+00> : vector<16x32xf32>
    %6 = tpu.matmul %4, %5, %cst_6 {dimension_numbers = #tpu.dot_dimension_numbers<[1], [0], [0], [1], [0, 0, 1, 1], [], []>} : vector<16x32xf32>, vector<32x32xf32>, vector<16x32xf32> -> vector<16x32xf32>
    %cst_7 = arith.constant 0.000000e+00 : f32
    %7 = vector.broadcast %cst_7 : f32 to vector<16x32xf32>
    %8 = arith.maximumf %6, %7 : vector<16x32xf32>
    %c0_8 = arith.constant 0 : index
    %c0_9 = arith.constant 0 : index
    %9 = vector.load %arg4[%c0_8, %c0_9] : memref<32x32xf32, #tpu.memory_space<vmem>>, vector<32x32xf32>
    %cst_10 = arith.constant dense<0.000000e+00> : vector<16x32xf32>
    %10 = tpu.matmul %8, %9, %cst_10 {dimension_numbers = #tpu.dot_dimension_numbers<[1], [0], [0], [1], [0, 0, 1, 1], [], []>} : vector<16x32xf32>, vector<32x32xf32>, vector<16x32xf32> -> vector<16x32xf32>
    %cst_11 = arith.constant 0.000000e+00 : f32
    %11 = vector.broadcast %cst_11 : f32 to vector<16x32xf32>
    %12 = arith.maximumf %10, %11 : vector<16x32xf32>
    %c0_12 = arith.constant 0 : index
    %c0_13 = arith.constant 0 : index
    %13 = vector.load %arg5[%c0_12, %c0_13] : memref<32x32xf32, #tpu.memory_space<vmem>>, vector<32x32xf32>
    %cst_14 = arith.constant dense<0.000000e+00> : vector<16x32xf32>
    %14 = tpu.matmul %12, %13, %cst_14 {dimension_numbers = #tpu.dot_dimension_numbers<[1], [0], [0], [1], [0, 0, 1, 1], [], []>} : vector<16x32xf32>, vector<32x32xf32>, vector<16x32xf32> -> vector<16x32xf32>
    %cst_15 = arith.constant 0.000000e+00 : f32
    %15 = vector.broadcast %cst_15 : f32 to vector<16x32xf32>
    %16 = arith.maximumf %14, %15 : vector<16x32xf32>
    %c0_16 = arith.constant 0 : index
    %c0_17 = arith.constant 0 : index
    %17 = vector.load %arg6[%c0_16, %c0_17] : memref<32x128xf32, #tpu.memory_space<vmem>>, vector<32x128xf32>
    %cst_18 = arith.constant dense<0.000000e+00> : vector<16x128xf32>
    %18 = tpu.matmul %16, %17, %cst_18 {dimension_numbers = #tpu.dot_dimension_numbers<[1], [0], [0], [1], [0, 0, 1, 1], [], []>} : vector<16x32xf32>, vector<32x128xf32>, vector<16x128xf32> -> vector<16x128xf32>
    %c0_19 = arith.constant 0 : index
    %c0_20 = arith.constant 0 : index
    %19 = vector.load %arg7[%c0_19, %c0_20] : memref<16x128xf32, #tpu.memory_space<vmem>>, vector<16x128xf32>
    tpu.vector_store %arg7[%c0_19, %c0_20], %18 {strides = array<i32>} : memref<16x128xf32, #tpu.memory_space<vmem>>, vector<16x128xf32>,
    return
  }
  func.func @transform_0(%arg0: i32) -> (i32, i32) {
    %c0_i32 = arith.constant 0 : i32
    %c0_i32_0 = arith.constant 0 : i32
    return %arg0, %c0_i32 : i32, i32
  }
  func.func @transform_1(%arg0: i32) -> (i32, i32) {
    %c0_i32 = arith.constant 0 : i32
    %c0_i32_0 = arith.constant 0 : i32
    %c0_i32_1 = arith.constant 0 : i32
    return %c0_i32, %c0_i32_0 : i32, i32
  }
  func.func @transform_2(%arg0: i32) -> (i32, i32) {
    %c0_i32 = arith.constant 0 : i32
    %c0_i32_0 = arith.constant 0 : i32
    %c0_i32_1 = arith.constant 0 : i32
    return %c0_i32, %c0_i32_0 : i32, i32
  }
  func.func @transform_3(%arg0: i32) -> (i32, i32) {
    %c0_i32 = arith.constant 0 : i32
    %c0_i32_0 = arith.constant 0 : i32
    %c0_i32_1 = arith.constant 0 : i32
    return %c0_i32, %c0_i32_0 : i32, i32
  }
  func.func @transform_4(%arg0: i32) -> (i32, i32) {
    %c0_i32 = arith.constant 0 : i32
    %c0_i32_0 = arith.constant 0 : i32
    %c0_i32_1 = arith.constant 0 : i32
    return %c0_i32, %c0_i32_0 : i32, i32
  }
  func.func @transform_5(%arg0: i32) -> (i32, i32) {
    %c0_i32 = arith.constant 0 : i32
    %c0_i32_0 = arith.constant 0 : i32
    %c0_i32_1 = arith.constant 0 : i32
    return %c0_i32, %c0_i32_0 : i32, i32
  }
  func.func @transform_6(%arg0: i32) -> (i32, i32) {
    %c0_i32 = arith.constant 0 : i32
    %c0_i32_0 = arith.constant 0 : i32
    return %arg0, %c0_i32 : i32, i32
  }
}

module attributes {stable_mosaic.version = 11 : i64} {
  func.func @_mlp_kernel(%arg0: i32, %arg1: memref<16x16xf32, #tpu.memory_space<vmem>>, %arg2: memref<16x32xf32, #tpu.memory_space<vmem>>, %arg3: memref<32x32xf32, #tpu.memory_space<vmem>>, %arg4: memref<32x32xf32, #tpu.memory_space<vmem>>, %arg5: memref<32x32xf32, #tpu.memory_space<vmem>>, %arg6: memref<32x128xf32, #tpu.memory_space<vmem>>, %arg7: memref<16x128xf32, #tpu.memory_space<vmem>>) attributes {dimension_semantics = [#tpu.dimension_semantics<parallel>], iteration_bounds = array<i64: 1>, scalar_prefetch = 0 : i64, scratch_operands = 0 : i64, tpu.core_type = #tpu.core_type<tc>, window_params = [{transform_indices = @transform_0, window_bounds = array<i64: 16, 16>}, {pipeline_mode = #tpu.pipeline_mode<synchronous>, transform_indices = @transform_1, window_bounds = array<i64: 16, 32>}, {pipeline_mode = #tpu.pipeline_mode<synchronous>, transform_indices = @transform_2, window_bounds = array<i64: 32, 32>}, {pipeline_mode = #tpu.pipeline_mode<synchronous>, transform_indices = @transform_3, window_bounds = array<i64: 32, 32>}, {pipeline_mode = #tpu.pipeline_mode<synchronous>, transform_indices = @transform_4, window_bounds = array<i64: 32, 32>}, {pipeline_mode = #tpu.pipeline_mode<synchronous>, transform_indices = @transform_5, window_bounds = array<i64: 32, 128>}, {transform_indices = @transform_6, window_bounds = array<i64: 16, 128>}]} {
    %c0 = arith.constant 0 : index
    %c0_0 = arith.constant 0 : index
    %0 = vector.load %arg1[%c0, %c0_0] : memref<16x16xf32, #tpu.memory_space<vmem>>, vector<16x16xf32>
    %c0_1 = arith.constant 0 : index
    %c0_2 = arith.constant 0 : index
    %1 = vector.load %arg2[%c0_1, %c0_2] : memref<16x32xf32, #tpu.memory_space<vmem>>, vector<16x32xf32>
    %cst = arith.constant dense<0.000000e+00> : vector<16x32xf32>
    %2 = tpu.matmul %0, %1, %cst {dimension_numbers = #tpu.dot_dimension_numbers<[1], [0], [0], [1], [0, 0, 1, 1], [], []>} : vector<16x16xf32>, vector<16x32xf32>, vector<16x32xf32> -> vector<16x32xf32>
    %cst_3 = arith.constant 0.000000e+00 : f32
    %3 = vector.broadcast %cst_3 : f32 to vector<16x32xf32>
    %4 = arith.maximumf %2, %3 : vector<16x32xf32>
    %c0_4 = arith.constant 0 : index
    %c0_5 = arith.constant 0 : index
    %5 = vector.load %arg3[%c0_4, %c0_5] : memref<32x32xf32, #tpu.memory_space<vmem>>, vector<32x32xf32>
    %cst_6 = arith.constant dense<0.000000e+00> : vector<16x32xf32>
    %6 = tpu.matmul %4, %5, %cst_6 {dimension_numbers = #tpu.dot_dimension_numbers<[1], [0], [0], [1], [0, 0, 1, 1], [], []>} : vector<16x32xf32>, vector<32x32xf32>, vector<16x32xf32> -> vector<16x32xf32>
    %cst_7 = arith.constant 0.000000e+00 : f32
    %7 = vector.broadcast %cst_7 : f32 to vector<16x32xf32>
    %8 = arith.maximumf %6, %7 : vector<16x32xf32>
    %c0_8 = arith.constant 0 : index
    %c0_9 = arith.constant 0 : index
    %9 = vector.load %arg4[%c0_8, %c0_9] : memref<32x32xf32, #tpu.memory_space<vmem>>, vector<32x32xf32>
    %cst_10 = arith.constant dense<0.000000e+00> : vector<16x32xf32>
    %10 = tpu.matmul %8, %9, %cst_10 {dimension_numbers = #tpu.dot_dimension_numbers<[1], [0], [0], [1], [0, 0, 1, 1], [], []>} : vector<16x32xf32>, vector<32x32xf32>, vector<16x32xf32> -> vector<16x32xf32>
    %cst_11 = arith.constant 0.000000e+00 : f32
    %11 = vector.broadcast %cst_11 : f32 to vector<16x32xf32>
    %12 = arith.maximumf %10, %11 : vector<16x32xf32>
    %c0_12 = arith.constant 0 : index
    %c0_13 = arith.constant 0 : index
    %13 = vector.load %arg5[%c0_12, %c0_13] : memref<32x32xf32, #tpu.memory_space<vmem>>, vector<32x32xf32>
    %cst_14 = arith.constant dense<0.000000e+00> : vector<16x32xf32>
    %14 = tpu.matmul %12, %13, %cst_14 {dimension_numbers = #tpu.dot_dimension_numbers<[1], [0], [0], [1], [0, 0, 1, 1], [], []>} : vector<16x32xf32>, vector<32x32xf32>, vector<16x32xf32> -> vector<16x32xf32>
    %cst_15 = arith.constant 0.000000e+00 : f32
    %15 = vector.broadcast %cst_15 : f32 to vector<16x32xf32>
    %16 = arith.maximumf %14, %15 : vector<16x32xf32>
    %c0_16 = arith.constant 0 : index
    %c0_17 = arith.constant 0 : index
    %17 = vector.load %arg6[%c0_16, %c0_17] : memref<32x128xf32, #tpu.memory_space<vmem>>, vector<32x128xf32>
    %cst_18 = arith.constant dense<0.000000e+00> : vector<16x128xf32>
    %18 = tpu.matmul %16, %17, %cst_18 {dimension_numbers = #tpu.dot_dimension_numbers<[1], [0], [0], [1], [0, 0, 1, 1], [], []>} : vector<16x32xf32>, vector<32x128xf32>, vector<16x128xf32> -> vector<16x128xf32>
    %c0_19 = arith.constant 0 : index
    %c0_20 = arith.constant 0 : index
    %19 = vector.load %arg7[%c0_19, %c0_20] : memref<16x128xf32, #tpu.memory_space<vmem>>, vector<16x128xf32>
    tpu.vector_store %arg7[%c0_19, %c0_20], %18 {strides = array<i32>} : memref<16x128xf32, #tpu.memory_space<vmem>>, vector<16x128xf32>,
    return
  }
  func.func @transform_0(%arg0: i32) -> (i32, i32) {
    %c0_i32 = arith.constant 0 : i32
    %c0_i32_0 = arith.constant 0 : i32
    return %arg0, %c0_i32 : i32, i32
  }
  func.func @transform_1(%arg0: i32) -> (i32, i32) {
    %c0_i32 = arith.constant 0 : i32
    %c0_i32_0 = arith.constant 0 : i32
    %c0_i32_1 = arith.constant 0 : i32
    return %c0_i32, %c0_i32_0 : i32, i32
  }
  func.func @transform_2(%arg0: i32) -> (i32, i32) {
    %c0_i32 = arith.constant 0 : i32
    %c0_i32_0 = arith.constant 0 : i32
    %c0_i32_1 = arith.constant 0 : i32
    return %c0_i32, %c0_i32_0 : i32, i32
  }
  func.func @transform_3(%arg0: i32) -> (i32, i32) {
    %c0_i32 = arith.constant 0 : i32
    %c0_i32_0 = arith.constant 0 : i32
    %c0_i32_1 = arith.constant 0 : i32
    return %c0_i32, %c0_i32_0 : i32, i32
  }
  func.func @transform_4(%arg0: i32) -> (i32, i32) {
    %c0_i32 = arith.constant 0 : i32
    %c0_i32_0 = arith.constant 0 : i32
    %c0_i32_1 = arith.constant 0 : i32
    return %c0_i32, %c0_i32_0 : i32, i32
  }
  func.func @transform_5(%arg0: i32) -> (i32, i32) {
    %c0_i32 = arith.constant 0 : i32
    %c0_i32_0 = arith.constant 0 : i32
    %c0_i32_1 = arith.constant 0 : i32
    return %c0_i32, %c0_i32_0 : i32, i32
  }
  func.func @transform_6(%arg0: i32) -> (i32, i32) {
    %c0_i32 = arith.constant 0 : i32
    %c0_i32_0 = arith.constant 0 : i32
    return %arg0, %c0_i32 : i32, i32
  }
}

</mosaic_0001>

<llo_original>
// kernel: tpu_custom_call.1
$region0: #{tpu_custom_call.1}
  #allocation0 [shape = 'u32[]', space=smem, size = 0x4, offset = 0x4, fixed_abs, tag = 'smem constant byte address 0x4 - core index']
  #allocation1 [shape = 'u32[72,128]{1,0:T(1,128)}', space=vmem, size = 0x9000, scoped, tag = 'internal scratch']
  %s0 = inlined_call_operand.hbm [shape: f32[16,16], index: 0, kind: input, shape index: {}]
  %s1 = inlined_call_operand.hbm [shape: f32[16,32], index: 1, kind: input, shape index: {}]
  %s2 = inlined_call_operand.hbm [shape: f32[32,32], index: 2, kind: input, shape index: {}]
  %s3 = inlined_call_operand.hbm [shape: f32[32,32], index: 3, kind: input, shape index: {}]
  %s4 = inlined_call_operand.hbm [shape: f32[32,32], index: 4, kind: input, shape index: {}]
  %s5 = inlined_call_operand.hbm [shape: f32[32,128], index: 5, kind: input, shape index: {}]
  %s6 = inlined_call_operand.hbm [shape: f32[16,128], index: 6, kind: output, shape index: {}]
  %s7 = sld [smem:[#allocation0]]
  $region58: #{tpu_custom_call.1} parent=0
    _
  %s9 = ssub.s32 1, %s7
  %s10 = scalar_select 0, %s9, %s7
  $region1: #{tpu_custom_call.1} parent=0
    #allocation2 [shape = 'u8[8192]{0}', space=vmem, size = 0x2000, scoped, tag = 'input window, operand 0, single buffered']
    #allocation3 [shape = 's32[1]{0}', space=sflag, size = 0x4, scoped, tag = 'scoped memory for tpu_custom_call.1']
    #allocation4 [shape = 's32[1]{0}', space=sflag, size = 0x4, scoped, tag = 'scoped memory for tpu_custom_call.1']
    #allocation5 [shape = 'u8[8192]{0}', space=vmem, size = 0x2000, scoped, tag = 'input window, operand 1, single buffered']
    #allocation6 [shape = 's32[1]{0}', space=sflag, size = 0x4, scoped, tag = 'scoped memory for tpu_custom_call.1']
    #allocation7 [shape = 'u8[16384]{0}', space=vmem, size = 0x4000, scoped, tag = 'input window, operand 2, single buffered']
    #allocation8 [shape = 'u8[16384]{0}', space=vmem, size = 0x4000, scoped, tag = 'input window, operand 3, single buffered']
    #allocation9 [shape = 's32[1]{0}', space=sflag, size = 0x4, scoped, tag = 'scoped memory for tpu_custom_call.1']
    #allocation10 [shape = 'u8[16384]{0}', space=vmem, size = 0x4000, scoped, tag = 'input window, operand 4, single buffered']
    #allocation11 [shape = 'u8[16384]{0}', space=vmem, size = 0x4000, scoped, tag = 'input window, operand 5, single buffered']
    #allocation12 [shape = 's32[1]{0}', space=sflag, size = 0x4, scoped, tag = 'scoped memory for tpu_custom_call.1']
    #allocation13 [shape = 'u8[8192]{0}', space=vmem, size = 0x2000, scoped, tag = 'output window, operand 0, single buffered']
    %11 = vsyncpa [#allocation3], 0
    %12 = vsyncpa [#allocation6], 0
    %13 = vsyncpa [#allocation9], 0
    %14 = vsyncpa [#allocation12], 0
    %15 = vsyncpa [#allocation4], 0
    // Predicated region
    $region2: #{tpu_custom_call.1} parent=1 // pred_check
      _
    $region3: #{tpu_custom_call.1} parent=1 // pred_check_branch
      %17 = sbr.rel (0) target = $region5
    $region4: #{tpu_custom_call.1} parent=1 // pred_region
      %19 = vsyncadd [#allocation3], 0
      %s20 = sshll.u32 %s0, 4
      %s21 = int_to_ptr.hbm [resolvable:$true] %s20
      %s22 = sshll.u32 [#allocation2], 4
      %s23 = int_to_ptr.vmem [resolvable:$true] %s22
      %28 = dma.hbm_to_vmem [thread:$0]  %s21, 256, %s23, [#allocation3], 128, 128, 8
    $region5: #{tpu_custom_call.1} parent=1 // pred_fallthru
      _
    // Predicated region
    $region6: #{tpu_custom_call.1} parent=1 // pred_check
      _
    $region7: #{tpu_custom_call.1} parent=1 // pred_check_branch
      %30 = sbr.rel (0) target = $region9
    $region8: #{tpu_custom_call.1} parent=1 // pred_region
      %32 = vsyncadd [#allocation6], 0
      %s33 = sshll.u32 %s1, 4
      %s34 = int_to_ptr.hbm [resolvable:$true] %s33
      %s35 = sshll.u32 [#allocation5], 4
      %s36 = int_to_ptr.vmem [resolvable:$true] %s35
      %41 = dma.hbm_to_vmem [thread:$0]  %s34, 256, %s36, [#allocation6], 128, 128, 8
    $region9: #{tpu_custom_call.1} parent=1 // pred_fallthru
      _
    // Predicated region
    $region10: #{tpu_custom_call.1} parent=1 // pred_check
      _
    $region11: #{tpu_custom_call.1} parent=1 // pred_check_branch
      %43 = sbr.rel (0) target = $region13
    $region12: #{tpu_custom_call.1} parent=1 // pred_region
      %45 = vsyncadd [#allocation6], 0
      %s46 = sshll.u32 %s2, 4
      %s47 = int_to_ptr.hbm [resolvable:$true] %s46
      %s48 = sshll.u32 [#allocation7], 4
      %s49 = int_to_ptr.vmem [resolvable:$true] %s48
      %54 = dma.hbm_to_vmem [thread:$0]  %s47, 512, %s49, [#allocation6], 128, 128, 8
    $region13: #{tpu_custom_call.1} parent=1 // pred_fallthru
      _
    // Predicated region
    $region14: #{tpu_custom_call.1} parent=1 // pred_check
      _
    $region15: #{tpu_custom_call.1} parent=1 // pred_check_branch
      %56 = sbr.rel (0) target = $region17
    $region16: #{tpu_custom_call.1} parent=1 // pred_region
      %58 = vsyncadd [#allocation9], 0
      %s59 = sshll.u32 %s3, 4
      %s60 = int_to_ptr.hbm [resolvable:$true] %s59
      %s61 = sshll.u32 [#allocation8], 4
      %s62 = int_to_ptr.vmem [resolvable:$true] %s61
      %67 = dma.hbm_to_vmem [thread:$0]  %s60, 512, %s62, [#allocation9], 128, 128, 8
    $region17: #{tpu_custom_call.1} parent=1 // pred_fallthru
      _
    // Predicated region
    $region18: #{tpu_custom_call.1} parent=1 // pred_check
      _
    $region19: #{tpu_custom_call.1} parent=1 // pred_check_branch
      %69 = sbr.rel (0) target = $region21
    $region20: #{tpu_custom_call.1} parent=1 // pred_region
      %71 = vsyncadd [#allocation9], 0
      %s72 = sshll.u32 %s4, 4
      %s73 = int_to_ptr.hbm [resolvable:$true] %s72
      %s74 = sshll.u32 [#allocation10], 4
      %s75 = int_to_ptr.vmem [resolvable:$true] %s74
      %80 = dma.hbm_to_vmem [thread:$0]  %s73, 512, %s75, [#allocation9], 128, 128, 8
    $region21: #{tpu_custom_call.1} parent=1 // pred_fallthru
      _
    // Predicated region
    $region22: #{tpu_custom_call.1} parent=1 // pred_check
      _
    $region23: #{tpu_custom_call.1} parent=1 // pred_check_branch
      %82 = sbr.rel (0) target = $region25
    $region24: #{tpu_custom_call.1} parent=1 // pred_region
      %84 = vsyncadd [#allocation12], 0
      %s85 = sshll.u32 %s5, 4
      %s86 = int_to_ptr.hbm [resolvable:$true] %s85
      %s87 = sshll.u32 [#allocation11], 4
      %s88 = int_to_ptr.vmem [resolvable:$true] %s87
      %93 = dma.hbm_to_vmem [thread:$0]  %s86, 512, %s88, [#allocation12], 128, 128, 8
    $region25: #{tpu_custom_call.1} parent=1 // pred_fallthru
      _
    // Predicated region
    $region26: #{tpu_custom_call.1} parent=1 // pred_check
      _
    $region27: #{tpu_custom_call.1} parent=1 // pred_check_branch
      %95 = sbr.rel (0) target = $region29
    $region28: #{tpu_custom_call.1} parent=1 // pred_region
      %97 = dma.done [#allocation3], 256
    $region29: #{tpu_custom_call.1} parent=1 // pred_fallthru
      _
    // Predicated region
    $region30: #{tpu_custom_call.1} parent=1 // pred_check
      _
    $region31: #{tpu_custom_call.1} parent=1 // pred_check_branch
      %99 = sbr.rel (0) target = $region33
    $region32: #{tpu_custom_call.1} parent=1 // pred_region
      %101 = dma.done [#allocation6], 256
    $region33: #{tpu_custom_call.1} parent=1 // pred_fallthru
      _
    // Predicated region
    $region34: #{tpu_custom_call.1} parent=1 // pred_check
      _
    $region35: #{tpu_custom_call.1} parent=1 // pred_check_branch
      %103 = sbr.rel (0) target = $region37
    $region36: #{tpu_custom_call.1} parent=1 // pred_region
      %105 = dma.done [#allocation6], 512
    $region37: #{tpu_custom_call.1} parent=1 // pred_fallthru
      _
    // Predicated region
    $region38: #{tpu_custom_call.1} parent=1 // pred_check
      _
    $region39: #{tpu_custom_call.1} parent=1 // pred_check_branch
      %107 = sbr.rel (0) target = $region41
    $region40: #{tpu_custom_call.1} parent=1 // pred_region
      %109 = dma.done [#allocation9], 512
    $region41: #{tpu_custom_call.1} parent=1 // pred_fallthru
      _
    // Predicated region
    $region42: #{tpu_custom_call.1} parent=1 // pred_check
      _
    $region43: #{tpu_custom_call.1} parent=1 // pred_check_branch
      %111 = sbr.rel (0) target = $region45
    $region44: #{tpu_custom_call.1} parent=1 // pred_region
      %113 = dma.done [#allocation9], 512
    $region45: #{tpu_custom_call.1} parent=1 // pred_fallthru
      _
    // Predicated region
    $region46: #{tpu_custom_call.1} parent=1 // pred_check
      _
    $region47: #{tpu_custom_call.1} parent=1 // pred_check_branch
      %115 = sbr.rel (0) target = $region49
    $region48: #{tpu_custom_call.1} parent=1 // pred_region
      %117 = dma.done [#allocation12], 512
    $region49: #{tpu_custom_call.1} parent=1 // pred_fallthru
      _
    %v118 = vld [vmem:[#allocation2] sm:$0xff]
    %v119 = vld [vmem:[#allocation2 + $0x8] sm:$0xff]
    %v120 = vld [vmem:[#allocation5] sm:$0xff]
    %v121 = vld [vmem:[#allocation5 + $0x8] sm:$0xff]
    %vm122 = vcmask 130048
    %v124 = vsel %vm122, %v118, 0
    %v127 = vsel %vm122, %v119, 0
    %129 = vmatpush.msra.mxu0 0.0
    %130 = vmatpush.msra.mxu0 0.0
    %131 = vmatpush.msra.mxu0 0.0
    %132 = vmatpush.msra.mxu0 0.0
    %133 = vmatpush.msra.mxu0 0.0
    %134 = vmatpush.msra.mxu0 0.0
    %135 = vmatpush.msra.mxu0 0.0
    %136 = vmatpush.msra.mxu0 0.0
    %137 = vmatpush.msra.mxu0 0.0
    %138 = vmatpush.msra.mxu0 0.0
    %139 = vmatpush.msra.mxu0 0.0
    %140 = vmatpush.msra.mxu0 0.0
    %141 = vmatpush.msra.mxu0 0.0
    %142 = vmatpush.msra.mxu0 0.0
    %143 = vmatpush.msra.mxu0 %v121
    %144 = vmatpush.msra.mxu0 %v120
    %145 = vmatmul.f32.gmra.mxu0 %v124
    %v146 = vpop.f32.mrf.mxu0
    %v147 = vadd.f32 0.0, %v146
    %148 = vmatmul.f32.gmra.mxu0 %v127
    %v149 = vpop.f32.mrf.mxu0
    %v150 = vadd.f32 0.0, %v149
    %151 = vdwg.mxu0
    %v152 = vmax.f32 %v147, 0.0
    %v153 = vmax.f32 %v150, 0.0
    %v154 = vld [vmem:[#allocation7] sm:$0xff]
    %v155 = vld [vmem:[#allocation7 + $0x8] sm:$0xff]
    %v156 = vld [vmem:[#allocation7 + $0x10] sm:$0xff]
    %v157 = vld [vmem:[#allocation7 + $0x18] sm:$0xff]
    %vm158 = vcmask 261120
    %v160 = vsel %vm158, %v152, 0
    %v163 = vsel %vm158, %v153, 0
    %165 = vmatpush.msra.mxu0 0.0
    %166 = vmatpush.msra.mxu0 0.0
    %167 = vmatpush.msra.mxu0 0.0
    %168 = vmatpush.msra.mxu0 0.0
    %169 = vmatpush.msra.mxu0 0.0
    %170 = vmatpush.msra.mxu0 0.0
    %171 = vmatpush.msra.mxu0 0.0
    %172 = vmatpush.msra.mxu0 0.0
    %173 = vmatpush.msra.mxu0 0.0
    %174 = vmatpush.msra.mxu0 0.0
    %175 = vmatpush.msra.mxu0 0.0
    %176 = vmatpush.msra.mxu0 0.0
    %177 = vmatpush.msra.mxu0 %v157
    %178 = vmatpush.msra.mxu0 %v156
    %179 = vmatpush.msra.mxu0 %v155
    %180 = vmatpush.msra.mxu0 %v154
    %181 = vmatmul.f32.gmra.mxu0 %v160
    %v182 = vpop.f32.mrf.mxu0
    %v183 = vadd.f32 0.0, %v182
    %184 = vmatmul.f32.gmra.mxu0 %v163
    %v185 = vpop.f32.mrf.mxu0
    %v186 = vadd.f32 0.0, %v185
    %187 = vdwg.mxu0
    %v188 = vmax.f32 %v183, 0.0
    %v189 = vmax.f32 %v186, 0.0
    %v190 = vld [vmem:[#allocation8] sm:$0xff]
    %v191 = vld [vmem:[#allocation8 + $0x8] sm:$0xff]
    %v192 = vld [vmem:[#allocation8 + $0x10] sm:$0xff]
    %v193 = vld [vmem:[#allocation8 + $0x18] sm:$0xff]
    %v195 = vsel %vm158, %v188, 0
    %v198 = vsel %vm158, %v189, 0
    %200 = vmatpush.msra.mxu0 0.0
    %201 = vmatpush.msra.mxu0 0.0
    %202 = vmatpush.msra.mxu0 0.0
    %203 = vmatpush.msra.mxu0 0.0
    %204 = vmatpush.msra.mxu0 0.0
    %205 = vmatpush.msra.mxu0 0.0
    %206 = vmatpush.msra.mxu0 0.0
    %207 = vmatpush.msra.mxu0 0.0
    %208 = vmatpush.msra.mxu0 0.0
    %209 = vmatpush.msra.mxu0 0.0
    %210 = vmatpush.msra.mxu0 0.0
    %211 = vmatpush.msra.mxu0 0.0
    %212 = vmatpush.msra.mxu0 %v193
    %213 = vmatpush.msra.mxu0 %v192
    %214 = vmatpush.msra.mxu0 %v191
    %215 = vmatpush.msra.mxu0 %v190
    %216 = vmatmul.f32.gmra.mxu0 %v195
    %v217 = vpop.f32.mrf.mxu0
    %v218 = vadd.f32 0.0, %v217
    %219 = vmatmul.f32.gmra.mxu0 %v198
    %v220 = vpop.f32.mrf.mxu0
    %v221 = vadd.f32 0.0, %v220
    %222 = vdwg.mxu0
    %v223 = vmax.f32 %v218, 0.0
    %v224 = vmax.f32 %v221, 0.0
    %v225 = vld [vmem:[#allocation10] sm:$0xff]
    %v226 = vld [vmem:[#allocation10 + $0x8] sm:$0xff]
    %v227 = vld [vmem:[#allocation10 + $0x10] sm:$0xff]
    %v228 = vld [vmem:[#allocation10 + $0x18] sm:$0xff]
    %v230 = vsel %vm158, %v223, 0
    %v233 = vsel %vm158, %v224, 0
    %235 = vmatpush.msra.mxu0 0.0
    %236 = vmatpush.msra.mxu0 0.0
    %237 = vmatpush.msra.mxu0 0.0
    %238 = vmatpush.msra.mxu0 0.0
    %239 = vmatpush.msra.mxu0 0.0
    %240 = vmatpush.msra.mxu0 0.0
    %241 = vmatpush.msra.mxu0 0.0
    %242 = vmatpush.msra.mxu0 0.0
    %243 = vmatpush.msra.mxu0 0.0
    %244 = vmatpush.msra.mxu0 0.0
    %245 = vmatpush.msra.mxu0 0.0
    %246 = vmatpush.msra.mxu0 0.0
    %247 = vmatpush.msra.mxu0 %v228
    %248 = vmatpush.msra.mxu0 %v227
    %249 = vmatpush.msra.mxu0 %v226
    %250 = vmatpush.msra.mxu0 %v225
    %251 = vmatmul.f32.gmra.mxu0 %v230
    %v252 = vpop.f32.mrf.mxu0
    %v253 = vadd.f32 0.0, %v252
    %254 = vmatmul.f32.gmra.mxu0 %v233
    %v255 = vpop.f32.mrf.mxu0
    %v256 = vadd.f32 0.0, %v255
    %257 = vdwg.mxu0
    %v258 = vmax.f32 %v253, 0.0
    %v259 = vmax.f32 %v256, 0.0
    %v260 = vld [vmem:[#allocation11] sm:$0xff]
    %v261 = vld [vmem:[#allocation11 + $0x8] sm:$0xff]
    %v262 = vld [vmem:[#allocation11 + $0x10] sm:$0xff]
    %v263 = vld [vmem:[#allocation11 + $0x18] sm:$0xff]
    %v265 = vsel %vm158, %v258, 0
    %v268 = vsel %vm158, %v259, 0
    %270 = vmatpush.msra.mxu0 0.0
    %271 = vmatpush.msra.mxu0 0.0
    %272 = vmatpush.msra.mxu0 0.0
    %273 = vmatpush.msra.mxu0 0.0
    %274 = vmatpush.msra.mxu0 0.0
    %275 = vmatpush.msra.mxu0 0.0
    %276 = vmatpush.msra.mxu0 0.0
    %277 = vmatpush.msra.mxu0 0.0
    %278 = vmatpush.msra.mxu0 0.0
    %279 = vmatpush.msra.mxu0 0.0
    %280 = vmatpush.msra.mxu0 0.0
    %281 = vmatpush.msra.mxu0 0.0
    %282 = vmatpush.msra.mxu0 %v263
    %283 = vmatpush.msra.mxu0 %v262
    %284 = vmatpush.msra.mxu0 %v261
    %285 = vmatpush.msra.mxu0 %v260
    %286 = vmatmul.f32.gmra.mxu0 %v265
    %v287 = vpop.f32.mrf.mxu0
    %v288 = vadd.f32 0.0, %v287
    %289 = vmatmul.f32.gmra.mxu0 %v268
    %v290 = vpop.f32.mrf.mxu0
    %v291 = vadd.f32 0.0, %v290
    %292 = vdwg.mxu0
    %293 = vst [vmem:[#allocation13] sm:$0xff] %v288
    %294 = vst [vmem:[#allocation13 + $0x8] sm:$0xff] %v291
    // Predicated region
    $region50: #{tpu_custom_call.1} parent=1 // pred_check
      _
    $region51: #{tpu_custom_call.1} parent=1 // pred_check_branch
      %296 = sbr.rel (0) target = $region53
    $region52: #{tpu_custom_call.1} parent=1 // pred_region
      %298 = vsyncadd [#allocation4], 0
      %s299 = sshll.u32 [#allocation13], 4
      %s300 = int_to_ptr.vmem [resolvable:$true] %s299
      %s301 = sshll.u32 %s6, 4
      %s302 = int_to_ptr.hbm [resolvable:$true] %s301
      %307 = dma.vmem_to_hbm [thread:$0]  %s300, 256, %s302, [#allocation4], 128, 128, 8
    $region53: #{tpu_custom_call.1} parent=1 // pred_fallthru
      _
    // Predicated region
    $region54: #{tpu_custom_call.1} parent=1 // pred_check
      _
    $region55: #{tpu_custom_call.1} parent=1 // pred_check_branch
      %309 = sbr.rel (0) target = $region57
    $region56: #{tpu_custom_call.1} parent=1 // pred_region
      %311 = dma.done [#allocation4], 256
    $region57: #{tpu_custom_call.1} parent=1 // pred_fallthru
      _
    %312 = vsyncpa [#allocation3], 1
    %313 = vsyncpa [#allocation6], 1
    %314 = vsyncpa [#allocation9], 1
    %315 = vsyncpa [#allocation12], 1
    %316 = vsyncpa [#allocation4], 1

// kernel: tpu_custom_call.1
$region0: #{tpu_custom_call.1}
  #allocation0 [shape = 'u32[]', space=smem, size = 0x4, offset = 0x4, fixed_abs, tag = 'smem constant byte address 0x4 - core index']
  #allocation1 [shape = 'u32[72,128]{1,0:T(1,128)}', space=vmem, size = 0x9000, scoped, tag = 'internal scratch']
  %s0 = inlined_call_operand.hbm [shape: f32[16,16], index: 0, kind: input, shape index: {}]
  %s1 = inlined_call_operand.hbm [shape: f32[16,32], index: 1, kind: input, shape index: {}]
  %s2 = inlined_call_operand.hbm [shape: f32[32,32], index: 2, kind: input, shape index: {}]
  %s3 = inlined_call_operand.hbm [shape: f32[32,32], index: 3, kind: input, shape index: {}]
  %s4 = inlined_call_operand.hbm [shape: f32[32,32], index: 4, kind: input, shape index: {}]
  %s5 = inlined_call_operand.hbm [shape: f32[32,128], index: 5, kind: input, shape index: {}]
  %s6 = inlined_call_operand.hbm [shape: f32[16,128], index: 6, kind: output, shape index: {}]
  %s7 = sld [smem:[#allocation0]]
  $region58: #{tpu_custom_call.1} parent=0
    _
  %s9 = ssub.s32 1, %s7
  %s10 = scalar_select 0, %s9, %s7
  $region1: #{tpu_custom_call.1} parent=0
    #allocation2 [shape = 'u8[8192]{0}', space=vmem, size = 0x2000, scoped, tag = 'input window, operand 0, single buffered']
    #allocation3 [shape = 's32[1]{0}', space=sflag, size = 0x4, scoped, tag = 'scoped memory for tpu_custom_call.1']
    #allocation4 [shape = 's32[1]{0}', space=sflag, size = 0x4, scoped, tag = 'scoped memory for tpu_custom_call.1']
    #allocation5 [shape = 'u8[8192]{0}', space=vmem, size = 0x2000, scoped, tag = 'input window, operand 1, single buffered']
    #allocation6 [shape = 's32[1]{0}', space=sflag, size = 0x4, scoped, tag = 'scoped memory for tpu_custom_call.1']
    #allocation7 [shape = 'u8[16384]{0}', space=vmem, size = 0x4000, scoped, tag = 'input window, operand 2, single buffered']
    #allocation8 [shape = 'u8[16384]{0}', space=vmem, size = 0x4000, scoped, tag = 'input window, operand 3, single buffered']
    #allocation9 [shape = 's32[1]{0}', space=sflag, size = 0x4, scoped, tag = 'scoped memory for tpu_custom_call.1']
    #allocation10 [shape = 'u8[16384]{0}', space=vmem, size = 0x4000, scoped, tag = 'input window, operand 4, single buffered']
    #allocation11 [shape = 'u8[16384]{0}', space=vmem, size = 0x4000, scoped, tag = 'input window, operand 5, single buffered']
    #allocation12 [shape = 's32[1]{0}', space=sflag, size = 0x4, scoped, tag = 'scoped memory for tpu_custom_call.1']
    #allocation13 [shape = 'u8[8192]{0}', space=vmem, size = 0x2000, scoped, tag = 'output window, operand 0, single buffered']
    %11 = vsyncpa [#allocation3], 0
    %12 = vsyncpa [#allocation6], 0
    %13 = vsyncpa [#allocation9], 0
    %14 = vsyncpa [#allocation12], 0
    %15 = vsyncpa [#allocation4], 0
    // Predicated region
    $region2: #{tpu_custom_call.1} parent=1 // pred_check
      _
    $region3: #{tpu_custom_call.1} parent=1 // pred_check_branch
      %17 = sbr.rel (0) target = $region5
    $region4: #{tpu_custom_call.1} parent=1 // pred_region
      %19 = vsyncadd [#allocation3], 0
      %s20 = sshll.u32 %s0, 4
      %s21 = int_to_ptr.hbm [resolvable:$true] %s20
      %s22 = sshll.u32 [#allocation2], 4
      %s23 = int_to_ptr.vmem [resolvable:$true] %s22
      %28 = dma.hbm_to_vmem [thread:$0]  %s21, 256, %s23, [#allocation3], 128, 128, 8
    $region5: #{tpu_custom_call.1} parent=1 // pred_fallthru
      _
    // Predicated region
    $region6: #{tpu_custom_call.1} parent=1 // pred_check
      _
    $region7: #{tpu_custom_call.1} parent=1 // pred_check_branch
      %30 = sbr.rel (0) target = $region9
    $region8: #{tpu_custom_call.1} parent=1 // pred_region
      %32 = vsyncadd [#allocation6], 0
      %s33 = sshll.u32 %s1, 4
      %s34 = int_to_ptr.hbm [resolvable:$true] %s33
      %s35 = sshll.u32 [#allocation5], 4
      %s36 = int_to_ptr.vmem [resolvable:$true] %s35
      %41 = dma.hbm_to_vmem [thread:$0]  %s34, 256, %s36, [#allocation6], 128, 128, 8
    $region9: #{tpu_custom_call.1} parent=1 // pred_fallthru
      _
    // Predicated region
    $region10: #{tpu_custom_call.1} parent=1 // pred_check
      _
    $region11: #{tpu_custom_call.1} parent=1 // pred_check_branch
      %43 = sbr.rel (0) target = $region13
    $region12: #{tpu_custom_call.1} parent=1 // pred_region
      %45 = vsyncadd [#allocation6], 0
      %s46 = sshll.u32 %s2, 4
      %s47 = int_to_ptr.hbm [resolvable:$true] %s46
      %s48 = sshll.u32 [#allocation7], 4
      %s49 = int_to_ptr.vmem [resolvable:$true] %s48
      %54 = dma.hbm_to_vmem [thread:$0]  %s47, 512, %s49, [#allocation6], 128, 128, 8
    $region13: #{tpu_custom_call.1} parent=1 // pred_fallthru
      _
    // Predicated region
    $region14: #{tpu_custom_call.1} parent=1 // pred_check
      _
    $region15: #{tpu_custom_call.1} parent=1 // pred_check_branch
      %56 = sbr.rel (0) target = $region17
    $region16: #{tpu_custom_call.1} parent=1 // pred_region
      %58 = vsyncadd [#allocation9], 0
      %s59 = sshll.u32 %s3, 4
      %s60 = int_to_ptr.hbm [resolvable:$true] %s59
      %s61 = sshll.u32 [#allocation8], 4
      %s62 = int_to_ptr.vmem [resolvable:$true] %s61
      %67 = dma.hbm_to_vmem [thread:$0]  %s60, 512, %s62, [#allocation9], 128, 128, 8
    $region17: #{tpu_custom_call.1} parent=1 // pred_fallthru
      _
    // Predicated region
    $region18: #{tpu_custom_call.1} parent=1 // pred_check
      _
    $region19: #{tpu_custom_call.1} parent=1 // pred_check_branch
      %69 = sbr.rel (0) target = $region21
    $region20: #{tpu_custom_call.1} parent=1 // pred_region
      %71 = vsyncadd [#allocation9], 0
      %s72 = sshll.u32 %s4, 4
      %s73 = int_to_ptr.hbm [resolvable:$true] %s72
      %s74 = sshll.u32 [#allocation10], 4
      %s75 = int_to_ptr.vmem [resolvable:$true] %s74
      %80 = dma.hbm_to_vmem [thread:$0]  %s73, 512, %s75, [#allocation9], 128, 128, 8
    $region21: #{tpu_custom_call.1} parent=1 // pred_fallthru
      _
    // Predicated region
    $region22: #{tpu_custom_call.1} parent=1 // pred_check
      _
    $region23: #{tpu_custom_call.1} parent=1 // pred_check_branch
      %82 = sbr.rel (0) target = $region25
    $region24: #{tpu_custom_call.1} parent=1 // pred_region
      %84 = vsyncadd [#allocation12], 0
      %s85 = sshll.u32 %s5, 4
      %s86 = int_to_ptr.hbm [resolvable:$true] %s85
      %s87 = sshll.u32 [#allocation11], 4
      %s88 = int_to_ptr.vmem [resolvable:$true] %s87
      %93 = dma.hbm_to_vmem [thread:$0]  %s86, 512, %s88, [#allocation12], 128, 128, 8
    $region25: #{tpu_custom_call.1} parent=1 // pred_fallthru
      _
    // Predicated region
    $region26: #{tpu_custom_call.1} parent=1 // pred_check
      _
    $region27: #{tpu_custom_call.1} parent=1 // pred_check_branch
      %95 = sbr.rel (0) target = $region29
    $region28: #{tpu_custom_call.1} parent=1 // pred_region
      %97 = dma.done [#allocation3], 256
    $region29: #{tpu_custom_call.1} parent=1 // pred_fallthru
      _
    // Predicated region
    $region30: #{tpu_custom_call.1} parent=1 // pred_check
      _
    $region31: #{tpu_custom_call.1} parent=1 // pred_check_branch
      %99 = sbr.rel (0) target = $region33
    $region32: #{tpu_custom_call.1} parent=1 // pred_region
      %101 = dma.done [#allocation6], 256
    $region33: #{tpu_custom_call.1} parent=1 // pred_fallthru
      _
    // Predicated region
    $region34: #{tpu_custom_call.1} parent=1 // pred_check
      _
    $region35: #{tpu_custom_call.1} parent=1 // pred_check_branch
      %103 = sbr.rel (0) target = $region37
    $region36: #{tpu_custom_call.1} parent=1 // pred_region
      %105 = dma.done [#allocation6], 512
    $region37: #{tpu_custom_call.1} parent=1 // pred_fallthru
      _
    // Predicated region
    $region38: #{tpu_custom_call.1} parent=1 // pred_check
      _
    $region39: #{tpu_custom_call.1} parent=1 // pred_check_branch
      %107 = sbr.rel (0) target = $region41
    $region40: #{tpu_custom_call.1} parent=1 // pred_region
      %109 = dma.done [#allocation9], 512
    $region41: #{tpu_custom_call.1} parent=1 // pred_fallthru
      _
    // Predicated region
    $region42: #{tpu_custom_call.1} parent=1 // pred_check
      _
    $region43: #{tpu_custom_call.1} parent=1 // pred_check_branch
      %111 = sbr.rel (0) target = $region45
    $region44: #{tpu_custom_call.1} parent=1 // pred_region
      %113 = dma.done [#allocation9], 512
    $region45: #{tpu_custom_call.1} parent=1 // pred_fallthru
      _
    // Predicated region
    $region46: #{tpu_custom_call.1} parent=1 // pred_check
      _
    $region47: #{tpu_custom_call.1} parent=1 // pred_check_branch
      %115 = sbr.rel (0) target = $region49
    $region48: #{tpu_custom_call.1} parent=1 // pred_region
      %117 = dma.done [#allocation12], 512
    $region49: #{tpu_custom_call.1} parent=1 // pred_fallthru
      _
    %v118 = vld [vmem:[#allocation2] sm:$0xff]
    %v119 = vld [vmem:[#allocation2 + $0x8] sm:$0xff]
    %v120 = vld [vmem:[#allocation5] sm:$0xff]
    %v121 = vld [vmem:[#allocation5 + $0x8] sm:$0xff]
    %vm122 = vcmask 130048
    %v124 = vsel %vm122, %v118, 0
    %v127 = vsel %vm122, %v119, 0
    %129 = vmatpush.msra.mxu0 0.0
    %130 = vmatpush.msra.mxu0 0.0
    %131 = vmatpush.msra.mxu0 0.0
    %132 = vmatpush.msra.mxu0 0.0
    %133 = vmatpush.msra.mxu0 0.0
    %134 = vmatpush.msra.mxu0 0.0
    %135 = vmatpush.msra.mxu0 0.0
    %136 = vmatpush.msra.mxu0 0.0
    %137 = vmatpush.msra.mxu0 0.0
    %138 = vmatpush.msra.mxu0 0.0
    %139 = vmatpush.msra.mxu0 0.0
    %140 = vmatpush.msra.mxu0 0.0
    %141 = vmatpush.msra.mxu0 0.0
    %142 = vmatpush.msra.mxu0 0.0
    %143 = vmatpush.msra.mxu0 %v121
    %144 = vmatpush.msra.mxu0 %v120
    %145 = vmatmul.f32.gmra.mxu0 %v124
    %v146 = vpop.f32.mrf.mxu0
    %v147 = vadd.f32 0.0, %v146
    %148 = vmatmul.f32.gmra.mxu0 %v127
    %v149 = vpop.f32.mrf.mxu0
    %v150 = vadd.f32 0.0, %v149
    %151 = vdwg.mxu0
    %v152 = vmax.f32 %v147, 0.0
    %v153 = vmax.f32 %v150, 0.0
    %v154 = vld [vmem:[#allocation7] sm:$0xff]
    %v155 = vld [vmem:[#allocation7 + $0x8] sm:$0xff]
    %v156 = vld [vmem:[#allocation7 + $0x10] sm:$0xff]
    %v157 = vld [vmem:[#allocation7 + $0x18] sm:$0xff]
    %vm158 = vcmask 261120
    %v160 = vsel %vm158, %v152, 0
    %v163 = vsel %vm158, %v153, 0
    %165 = vmatpush.msra.mxu0 0.0
    %166 = vmatpush.msra.mxu0 0.0
    %167 = vmatpush.msra.mxu0 0.0
    %168 = vmatpush.msra.mxu0 0.0
    %169 = vmatpush.msra.mxu0 0.0
    %170 = vmatpush.msra.mxu0 0.0
    %171 = vmatpush.msra.mxu0 0.0
    %172 = vmatpush.msra.mxu0 0.0
    %173 = vmatpush.msra.mxu0 0.0
    %174 = vmatpush.msra.mxu0 0.0
    %175 = vmatpush.msra.mxu0 0.0
    %176 = vmatpush.msra.mxu0 0.0
    %177 = vmatpush.msra.mxu0 %v157
    %178 = vmatpush.msra.mxu0 %v156
    %179 = vmatpush.msra.mxu0 %v155
    %180 = vmatpush.msra.mxu0 %v154
    %181 = vmatmul.f32.gmra.mxu0 %v160
    %v182 = vpop.f32.mrf.mxu0
    %v183 = vadd.f32 0.0, %v182
    %184 = vmatmul.f32.gmra.mxu0 %v163
    %v185 = vpop.f32.mrf.mxu0
    %v186 = vadd.f32 0.0, %v185
    %187 = vdwg.mxu0
    %v188 = vmax.f32 %v183, 0.0
    %v189 = vmax.f32 %v186, 0.0
    %v190 = vld [vmem:[#allocation8] sm:$0xff]
    %v191 = vld [vmem:[#allocation8 + $0x8] sm:$0xff]
    %v192 = vld [vmem:[#allocation8 + $0x10] sm:$0xff]
    %v193 = vld [vmem:[#allocation8 + $0x18] sm:$0xff]
    %v195 = vsel %vm158, %v188, 0
    %v198 = vsel %vm158, %v189, 0
    %200 = vmatpush.msra.mxu0 0.0
    %201 = vmatpush.msra.mxu0 0.0
    %202 = vmatpush.msra.mxu0 0.0
    %203 = vmatpush.msra.mxu0 0.0
    %204 = vmatpush.msra.mxu0 0.0
    %205 = vmatpush.msra.mxu0 0.0
    %206 = vmatpush.msra.mxu0 0.0
    %207 = vmatpush.msra.mxu0 0.0
    %208 = vmatpush.msra.mxu0 0.0
    %209 = vmatpush.msra.mxu0 0.0
    %210 = vmatpush.msra.mxu0 0.0
    %211 = vmatpush.msra.mxu0 0.0
    %212 = vmatpush.msra.mxu0 %v193
    %213 = vmatpush.msra.mxu0 %v192
    %214 = vmatpush.msra.mxu0 %v191
    %215 = vmatpush.msra.mxu0 %v190
    %216 = vmatmul.f32.gmra.mxu0 %v195
    %v217 = vpop.f32.mrf.mxu0
    %v218 = vadd.f32 0.0, %v217
    %219 = vmatmul.f32.gmra.mxu0 %v198
    %v220 = vpop.f32.mrf.mxu0
    %v221 = vadd.f32 0.0, %v220
    %222 = vdwg.mxu0
    %v223 = vmax.f32 %v218, 0.0
    %v224 = vmax.f32 %v221, 0.0
    %v225 = vld [vmem:[#allocation10] sm:$0xff]
    %v226 = vld [vmem:[#allocation10 + $0x8] sm:$0xff]
    %v227 = vld [vmem:[#allocation10 + $0x10] sm:$0xff]
    %v228 = vld [vmem:[#allocation10 + $0x18] sm:$0xff]
    %v230 = vsel %vm158, %v223, 0
    %v233 = vsel %vm158, %v224, 0
    %235 = vmatpush.msra.mxu0 0.0
    %236 = vmatpush.msra.mxu0 0.0
    %237 = vmatpush.msra.mxu0 0.0
    %238 = vmatpush.msra.mxu0 0.0
    %239 = vmatpush.msra.mxu0 0.0
    %240 = vmatpush.msra.mxu0 0.0
    %241 = vmatpush.msra.mxu0 0.0
    %242 = vmatpush.msra.mxu0 0.0
    %243 = vmatpush.msra.mxu0 0.0
    %244 = vmatpush.msra.mxu0 0.0
    %245 = vmatpush.msra.mxu0 0.0
    %246 = vmatpush.msra.mxu0 0.0
    %247 = vmatpush.msra.mxu0 %v228
    %248 = vmatpush.msra.mxu0 %v227
    %249 = vmatpush.msra.mxu0 %v226
    %250 = vmatpush.msra.mxu0 %v225
    %251 = vmatmul.f32.gmra.mxu0 %v230
    %v252 = vpop.f32.mrf.mxu0
    %v253 = vadd.f32 0.0, %v252
    %254 = vmatmul.f32.gmra.mxu0 %v233
    %v255 = vpop.f32.mrf.mxu0
    %v256 = vadd.f32 0.0, %v255
    %257 = vdwg.mxu0
    %v258 = vmax.f32 %v253, 0.0
    %v259 = vmax.f32 %v256, 0.0
    %v260 = vld [vmem:[#allocation11] sm:$0xff]
    %v261 = vld [vmem:[#allocation11 + $0x8] sm:$0xff]
    %v262 = vld [vmem:[#allocation11 + $0x10] sm:$0xff]
    %v263 = vld [vmem:[#allocation11 + $0x18] sm:$0xff]
    %v265 = vsel %vm158, %v258, 0
    %v268 = vsel %vm158, %v259, 0
    %270 = vmatpush.msra.mxu0 0.0
    %271 = vmatpush.msra.mxu0 0.0
    %272 = vmatpush.msra.mxu0 0.0
    %273 = vmatpush.msra.mxu0 0.0
    %274 = vmatpush.msra.mxu0 0.0
    %275 = vmatpush.msra.mxu0 0.0
    %276 = vmatpush.msra.mxu0 0.0
    %277 = vmatpush.msra.mxu0 0.0
    %278 = vmatpush.msra.mxu0 0.0
    %279 = vmatpush.msra.mxu0 0.0
    %280 = vmatpush.msra.mxu0 0.0
    %281 = vmatpush.msra.mxu0 0.0
    %282 = vmatpush.msra.mxu0 %v263
    %283 = vmatpush.msra.mxu0 %v262
    %284 = vmatpush.msra.mxu0 %v261
    %285 = vmatpush.msra.mxu0 %v260
    %286 = vmatmul.f32.gmra.mxu0 %v265
    %v287 = vpop.f32.mrf.mxu0
    %v288 = vadd.f32 0.0, %v287
    %289 = vmatmul.f32.gmra.mxu0 %v268
    %v290 = vpop.f32.mrf.mxu0
    %v291 = vadd.f32 0.0, %v290
    %292 = vdwg.mxu0
    %293 = vst [vmem:[#allocation13] sm:$0xff] %v288
    %294 = vst [vmem:[#allocation13 + $0x8] sm:$0xff] %v291
    // Predicated region
    $region50: #{tpu_custom_call.1} parent=1 // pred_check
      _
    $region51: #{tpu_custom_call.1} parent=1 // pred_check_branch
      %296 = sbr.rel (0) target = $region53
    $region52: #{tpu_custom_call.1} parent=1 // pred_region
      %298 = vsyncadd [#allocation4], 0
      %s299 = sshll.u32 [#allocation13], 4
      %s300 = int_to_ptr.vmem [resolvable:$true] %s299
      %s301 = sshll.u32 %s6, 4
      %s302 = int_to_ptr.hbm [resolvable:$true] %s301
      %307 = dma.vmem_to_hbm [thread:$0]  %s300, 256, %s302, [#allocation4], 128, 128, 8
    $region53: #{tpu_custom_call.1} parent=1 // pred_fallthru
      _
    // Predicated region
    $region54: #{tpu_custom_call.1} parent=1 // pred_check
      _
    $region55: #{tpu_custom_call.1} parent=1 // pred_check_branch
      %309 = sbr.rel (0) target = $region57
    $region56: #{tpu_custom_call.1} parent=1 // pred_region
      %311 = dma.done [#allocation4], 256
    $region57: #{tpu_custom_call.1} parent=1 // pred_fallthru
      _
    %312 = vsyncpa [#allocation3], 1
    %313 = vsyncpa [#allocation6], 1
    %314 = vsyncpa [#allocation9], 1
    %315 = vsyncpa [#allocation12], 1
    %316 = vsyncpa [#allocation4], 1

</llo_original>
